<compile_context>
chip_gen: v7x
topology: tpu7x:2x2x1
jax: 0.10.0
libtpu: 0.0.40
codegen_flags: <defaults>
</compile_context>

<pallas_src>
import functools

import jax
import jax.numpy as jnp
from jax.experimental import pallas as pl
from jax.experimental.pallas import tpu as pltpu


def _round_up(x, m):
    return ((x + m - 1) // m) * m


def _pick_col_tile(c, cap=2048):
    """Class-axis tile: full C if small enough, else a lane-dense multiple of 128."""
    if c <= cap:
        return c                      # block dim == full array dim is always legal
    if c % 128 == 0:
        for t in range(cap - cap % 128, 127, -128):
            if c % t == 0:            # evenly dividing tile -> no tail masking
                return t
    return cap - cap % 128            # ragged class tail, masked in-kernel


def _ls_kernel(target_ref, pred_ref, loss_ref,
               m_sc, l_sc, psum_sc, tval_sc,
               *, confidence, sm_per, num_classes, col_tile, masked):
    # target_ref: (tn, 1) int32 | pred_ref: (tn, tc) | loss_ref: (tn, 1) f32
    j = pl.program_id(1)

    pred = pred_ref[...].astype(jnp.float32)            # math in f32
    tgt = target_ref[...]                                # (tn, 1)

    @pl.when(j == 0)
    def _():
        m_sc[...] = jnp.full_like(m_sc, -jnp.inf)
        l_sc[...] = jnp.zeros_like(l_sc)
        psum_sc[...] = jnp.zeros_like(psum_sc)
        tval_sc[...] = jnp.zeros_like(tval_sc)

    # Global class index of every lane in this tile (also used for target hit).
    col_ids = jax.lax.broadcasted_iota(jnp.int32, pred.shape, 1) + j * col_tile

    if masked:
        valid = col_ids < num_classes
        pred_lse = jnp.where(valid, pred, -jnp.inf)      # drop ragged-tail lanes
        pred_sum = jnp.where(valid, pred, 0.0)
    else:
        pred_lse = pred
        pred_sum = pred

    # Online logsumexp over the class axis.
    blk_max = jnp.max(pred_lse, axis=-1, keepdims=True)
    m_new = jnp.maximum(m_sc[...], blk_max)
    l_sc[...] = (l_sc[...] * jnp.exp(m_sc[...] - m_new)
                 + jnp.sum(jnp.exp(pred_lse - m_new), axis=-1, keepdims=True))
    m_sc[...] = m_new

    # Running sum_c pred[i, c].
    psum_sc[...] += jnp.sum(pred_sum, axis=-1, keepdims=True)

    # Running pred[i, target_i] (exactly one class tile contains the target).
    hit = col_ids == tgt
    tval_sc[...] += jnp.sum(jnp.where(hit, pred, 0.0), axis=-1, keepdims=True)

    @pl.when(j == pl.num_programs(1) - 1)
    def _():
        lse = m_sc[...] + jnp.log(l_sc[...])
        logp_t = tval_sc[...] - lse
        sum_logp = psum_sc[...] - float(num_classes) * lse
        loss = -(confidence * logp_t + sm_per * (sum_logp - logp_t))
        loss_ref[...] = loss.astype(loss_ref.dtype)


def label_smoothing_loss(pred, target, *, smoothing=0.0,
                         row_tile=None, col_tile=None):
    """Forward pass of LabelSmoothingLoss. Returns a scalar (mean over batch)."""
    n, c = pred.shape

    # Row tile: multiple of 8 sublanes.
    if row_tile is None:
        row_tile = min(256, _round_up(n, 8))
    row_tile = _round_up(row_tile, 8)

    # Class tile: full C, or a lane-dense multiple of 128.
    if col_tile is None:
        col_tile = _pick_col_tile(c)
    assert col_tile == c or col_tile % 128 == 0, "col_tile must be C or a multiple of 128"
    masked = (c % col_tile) != 0

    target2d = target.astype(jnp.int32).reshape(n, 1)

    confidence = 1.0 - float(smoothing)
    sm_per = float(smoothing) / (c - 1) if c > 1 else 0.0

    kernel = functools.partial(
        _ls_kernel,
        confidence=confidence,
        sm_per=sm_per,
        num_classes=c,
        col_tile=col_tile,
        masked=masked,
    )

    row_losses = pl.pallas_call(
        kernel,
        out_shape=jax.ShapeDtypeStruct((n, 1), jnp.float32),
        grid_spec=pltpu.PrefetchScalarGridSpec(
            num_scalar_prefetch=0,
            grid=(pl.cdiv(n, row_tile), pl.cdiv(c, col_tile)),
            in_specs=[
                pl.BlockSpec((row_tile, 1), lambda i, j: (i, 0)),         # target
                pl.BlockSpec((row_tile, col_tile), lambda i, j: (i, j)),  # pred
            ],
            out_specs=pl.BlockSpec((row_tile, 1), lambda i, j: (i, 0)),
            scratch_shapes=[pltpu.VMEM((row_tile, 1), jnp.float32)] * 4,
        ),
        compiler_params=pltpu.CompilerParams(
            dimension_semantics=("parallel", "arbitrary"),
        ),
    )(target2d, pred)

    # TODO(synk): the final tiny (N,)-vector mean stays in plain JAX; all N*C
    # streaming / log-softmax work lives in the kernel.
    return jnp.mean(row_losses[:, 0])


def _reference(pred, target, classes, smoothing):
    # Pure-JAX mirror of the PyTorch forward.
    logp = jax.nn.log_softmax(pred.astype(jnp.float32), axis=-1)
    confidence = 1.0 - smoothing
    sm = smoothing / (classes - 1)
    true_dist = jnp.full((pred.shape[0], classes), sm, jnp.float32)
    true_dist = true_dist.at[jnp.arange(pred.shape[0]), target].set(confidence)
    return jnp.mean(jnp.sum(-true_dist * logp, axis=-1))


if __name__ == "__main__":
    key = jax.random.PRNGKey(0)
    smoothing = 0.1
    k1, k2, k3, k4 = jax.random.split(key, 4)

    # Case 1: lane-aligned C, ragged batch (exercises partial row tiles and the
    # online logsumexp across multiple class tiles on a 3x2 grid).
    N1, C1 = 20, 256
    pred1 = jax.random.normal(k1, (N1, C1), jnp.float32) * 2.0
    tgt1 = jax.random.randint(k2, (N1,), 0, C1).astype(jnp.int32)
    out1 = label_smoothing_loss(pred1, tgt1, smoothing=smoothing,
                                row_tile=8, col_tile=128)
    jax.block_until_ready(out1)
    ref1 = _reference(pred1, tgt1, C1, smoothing)
    assert jnp.allclose(out1, ref1, atol=1e-4, rtol=1e-5), (out1, ref1)

    # Case 2: non-128-multiple C (exercises the masked ragged class tail).
    N2, C2 = 16, 200
    pred2 = jax.random.normal(k3, (N2, C2), jnp.float32) * 2.0
    tgt2 = jax.random.randint(k4, (N2,), 0, C2).astype(jnp.int32)
    out2 = label_smoothing_loss(pred2, tgt2, smoothing=smoothing,
                                row_tile=8, col_tile=128)
    jax.block_until_ready(out2)
    ref2 = _reference(pred2, tgt2, C2, smoothing)
    assert jnp.allclose(out2, ref2, atol=1e-4, rtol=1e-5), (out2, ref2)

    print("KERNEL_OK")
</pallas_src>

<mosaic_0001>
module attributes {stable_mosaic.version = 11 : i64} {
  func.func @_ls_kernel(%arg0: i32, %arg1: i32, %arg2: memref<8x1xi32, #tpu.memory_space<vmem>>, %arg3: memref<8x128xf32, #tpu.memory_space<vmem>>, %arg4: memref<8x1xf32, #tpu.memory_space<vmem>>, %arg5: memref<8x1xf32, #tpu.memory_space<vmem>>, %arg6: memref<8x1xf32, #tpu.memory_space<vmem>>, %arg7: memref<8x1xf32, #tpu.memory_space<vmem>>, %arg8: memref<8x1xf32, #tpu.memory_space<vmem>>) attributes {dimension_semantics = [#tpu.dimension_semantics<parallel>, #tpu.dimension_semantics<arbitrary>], iteration_bounds = array<i64: 3, 2>, scalar_prefetch = 0 : i64, scratch_operands = 4 : i64, tpu.core_type = #tpu.core_type<tc>, window_params = [{transform_indices = @transform_0, window_bounds = array<i64: 8, 1>}, {transform_indices = @transform_1, window_bounds = array<i64: 8, 128>}, {transform_indices = @transform_2, window_bounds = array<i64: 8, 1>}]} {
    %c0 = arith.constant 0 : index
    %c0_0 = arith.constant 0 : index
    %0 = vector.load %arg3[%c0, %c0_0] : memref<8x128xf32, #tpu.memory_space<vmem>>, vector<8x128xf32>
    %c0_1 = arith.constant 0 : index
    %c0_2 = arith.constant 0 : index
    %1 = vector.load %arg2[%c0_1, %c0_2] : memref<8x1xi32, #tpu.memory_space<vmem>>, vector<8x1xi32>
    %c0_i32 = arith.constant 0 : i32
    %2 = arith.cmpi eq, %arg1, %c0_i32 : i32
    %3 = arith.extui %2 : i1 to i32
    %c0_i32_3 = arith.constant 0 : i32
    %4 = arith.cmpi ne, %3, %c0_i32_3 : i32
    scf.if %4 {
      %cst_27 = arith.constant 0xFF800000 : f32
      %43 = vector.broadcast %cst_27 : f32 to vector<8x1xf32>
      %c0_28 = arith.constant 0 : index
      %c0_29 = arith.constant 0 : index
      %44 = vector.load %arg5[%c0_28, %c0_29] : memref<8x1xf32, #tpu.memory_space<vmem>>, vector<8x1xf32>
      tpu.vector_store %arg5[%c0_28, %c0_29], %43 {strides = array<i32>} : memref<8x1xf32, #tpu.memory_space<vmem>>, vector<8x1xf32>,
      %cst_30 = arith.constant 0.000000e+00 : f32
      %45 = vector.broadcast %cst_30 : f32 to vector<8x1xf32>
      %c0_31 = arith.constant 0 : index
      %c0_32 = arith.constant 0 : index
      %46 = vector.load %arg6[%c0_31, %c0_32] : memref<8x1xf32, #tpu.memory_space<vmem>>, vector<8x1xf32>
      tpu.vector_store %arg6[%c0_31, %c0_32], %45 {strides = array<i32>} : memref<8x1xf32, #tpu.memory_space<vmem>>, vector<8x1xf32>,
      %cst_33 = arith.constant 0.000000e+00 : f32
      %47 = vector.broadcast %cst_33 : f32 to vector<8x1xf32>
      %c0_34 = arith.constant 0 : index
      %c0_35 = arith.constant 0 : index
      %48 = vector.load %arg7[%c0_34, %c0_35] : memref<8x1xf32, #tpu.memory_space<vmem>>, vector<8x1xf32>
      tpu.vector_store %arg7[%c0_34, %c0_35], %47 {strides = array<i32>} : memref<8x1xf32, #tpu.memory_space<vmem>>, vector<8x1xf32>,
      %cst_36 = arith.constant 0.000000e+00 : f32
      %49 = vector.broadcast %cst_36 : f32 to vector<8x1xf32>
      %c0_37 = arith.constant 0 : index
      %c0_38 = arith.constant 0 : index
      %50 = vector.load %arg8[%c0_37, %c0_38] : memref<8x1xf32, #tpu.memory_space<vmem>>, vector<8x1xf32>
      tpu.vector_store %arg8[%c0_37, %c0_38], %49 {strides = array<i32>} : memref<8x1xf32, #tpu.memory_space<vmem>>, vector<8x1xf32>,
    } else {
    }
    %5 = tpu.iota {dimensions = array<i32: 1>} : vector<8x128xi32>
    %c128_i32 = arith.constant 128 : i32
    %6 = arith.muli %arg1, %c128_i32 : i32
    %7 = vector.broadcast %6 : i32 to vector<8x128xi32>
    %8 = arith.addi %5, %7 : vector<8x128xi32>
    %cst = arith.constant dense<0xFF800000> : vector<8xf32>
    %9 = vector.multi_reduction <maximumf>, %0, %cst [1] : vector<8x128xf32> to vector<8xf32>
    %10 = vector.shape_cast %9 : vector<8xf32> to vector<8x1xf32>
    %c0_4 = arith.constant 0 : index
    %c0_5 = arith.constant 0 : index
    %11 = vector.load %arg5[%c0_4, %c0_5] : memref<8x1xf32, #tpu.memory_space<vmem>>, vector<8x1xf32>
    %12 = arith.maximumf %11, %10 : vector<8x1xf32>
    %c0_6 = arith.constant 0 : index
    %c0_7 = arith.constant 0 : index
    %13 = vector.load %arg6[%c0_6, %c0_7] : memref<8x1xf32, #tpu.memory_space<vmem>>, vector<8x1xf32>
    %c0_8 = arith.constant 0 : index
    %c0_9 = arith.constant 0 : index
    %14 = vector.load %arg5[%c0_8, %c0_9] : memref<8x1xf32, #tpu.memory_space<vmem>>, vector<8x1xf32>
    %15 = arith.subf %14, %12 : vector<8x1xf32>
    %16 = math.exp %15 : vector<8x1xf32>
    %17 = arith.mulf %13, %16 : vector<8x1xf32>
    %18 = vector.broadcast %12 : vector<8x1xf32> to vector<8x128xf32>
    %19 = arith.subf %0, %18 : vector<8x128xf32>
    %20 = math.exp %19 : vector<8x128xf32>
    %cst_10 = arith.constant dense<0.000000e+00> : vector<8xf32>
    %21 = vector.multi_reduction <add>, %20, %cst_10 [1] : vector<8x128xf32> to vector<8xf32>
    %22 = vector.shape_cast %21 : vector<8xf32> to vector<8x1xf32>
    %23 = arith.addf %17, %22 : vector<8x1xf32>
    %c0_11 = arith.constant 0 : index
    %c0_12 = arith.constant 0 : index
    %24 = vector.load %arg6[%c0_11, %c0_12] : memref<8x1xf32, #tpu.memory_space<vmem>>, vector<8x1xf32>
    tpu.vector_store %arg6[%c0_11, %c0_12], %23 {strides = array<i32>} : memref<8x1xf32, #tpu.memory_space<vmem>>, vector<8x1xf32>,
    %c0_13 = arith.constant 0 : index
    %c0_14 = arith.constant 0 : index
    %25 = vector.load %arg5[%c0_13, %c0_14] : memref<8x1xf32, #tpu.memory_space<vmem>>, vector<8x1xf32>
    tpu.vector_store %arg5[%c0_13, %c0_14], %12 {strides = array<i32>} : memref<8x1xf32, #tpu.memory_space<vmem>>, vector<8x1xf32>,
    %c0_15 = arith.constant 0 : index
    %c0_16 = arith.constant 0 : index
    %26 = vector.load %arg7[%c0_15, %c0_16] : memref<8x1xf32, #tpu.memory_space<vmem>>, vector<8x1xf32>
    %cst_17 = arith.constant dense<0.000000e+00> : vector<8xf32>
    %27 = vector.multi_reduction <add>, %0, %cst_17 [1] : vector<8x128xf32> to vector<8xf32>
    %28 = vector.shape_cast %27 : vector<8xf32> to vector<8x1xf32>
    %29 = arith.addf %26, %28 : vector<8x1xf32>
    %c0_18 = arith.constant 0 : index
    %c0_19 = arith.constant 0 : index
    %30 = vector.load %arg7[%c0_18, %c0_19] : memref<8x1xf32, #tpu.memory_space<vmem>>, vector<8x1xf32>
    tpu.vector_store %arg7[%c0_18, %c0_19], %29 {strides = array<i32>} : memref<8x1xf32, #tpu.memory_space<vmem>>, vector<8x1xf32>,
    %31 = vector.broadcast %1 : vector<8x1xi32> to vector<8x128xi32>
    %32 = arith.cmpi eq, %8, %31 : vector<8x128xi32>
    %c0_20 = arith.constant 0 : index
    %c0_21 = arith.constant 0 : index
    %33 = vector.load %arg8[%c0_20, %c0_21] : memref<8x1xf32, #tpu.memory_space<vmem>>, vector<8x1xf32>
    %cst_22 = arith.constant 0.000000e+00 : f32
    %34 = vector.broadcast %cst_22 : f32 to vector<8x128xf32>
    %35 = arith.select %32, %0, %34 : vector<8x128xi1>, vector<8x128xf32>
    %cst_23 = arith.constant dense<0.000000e+00> : vector<8xf32>
    %36 = vector.multi_reduction <add>, %35, %cst_23 [1] : vector<8x128xf32> to vector<8xf32>
    %37 = vector.shape_cast %36 : vector<8xf32> to vector<8x1xf32>
    %38 = arith.addf %33, %37 : vector<8x1xf32>
    %c0_24 = arith.constant 0 : index
    %c0_25 = arith.constant 0 : index
    %39 = vector.load %arg8[%c0_24, %c0_25] : memref<8x1xf32, #tpu.memory_space<vmem>>, vector<8x1xf32>
    tpu.vector_store %arg8[%c0_24, %c0_25], %38 {strides = array<i32>} : memref<8x1xf32, #tpu.memory_space<vmem>>, vector<8x1xf32>,
    %c1_i32 = arith.constant 1 : i32
    %40 = arith.cmpi eq, %arg1, %c1_i32 : i32
    %41 = arith.extui %40 : i1 to i32
    %c0_i32_26 = arith.constant 0 : i32
    %42 = arith.cmpi ne, %41, %c0_i32_26 : i32
    scf.if %42 {
      %c0_27 = arith.constant 0 : index
      %c0_28 = arith.constant 0 : index
      %43 = vector.load %arg5[%c0_27, %c0_28] : memref<8x1xf32, #tpu.memory_space<vmem>>, vector<8x1xf32>
      %c0_29 = arith.constant 0 : index
      %c0_30 = arith.constant 0 : index
      %44 = vector.load %arg6[%c0_29, %c0_30] : memref<8x1xf32, #tpu.memory_space<vmem>>, vector<8x1xf32>
      %45 = math.log %44 : vector<8x1xf32>
      %46 = arith.addf %43, %45 : vector<8x1xf32>
      %c0_31 = arith.constant 0 : index
      %c0_32 = arith.constant 0 : index
      %47 = vector.load %arg8[%c0_31, %c0_32] : memref<8x1xf32, #tpu.memory_space<vmem>>, vector<8x1xf32>
      %48 = arith.subf %47, %46 : vector<8x1xf32>
      %c0_33 = arith.constant 0 : index
      %c0_34 = arith.constant 0 : index
      %49 = vector.load %arg7[%c0_33, %c0_34] : memref<8x1xf32, #tpu.memory_space<vmem>>, vector<8x1xf32>
      %cst_35 = arith.constant 2.560000e+02 : f32
      %50 = vector.broadcast %cst_35 : f32 to vector<8x1xf32>
      %51 = arith.mulf %50, %46 : vector<8x1xf32>
      %52 = arith.subf %49, %51 : vector<8x1xf32>
      %cst_36 = arith.constant 0.899999976 : f32
      %53 = vector.broadcast %cst_36 : f32 to vector<8x1xf32>
      %54 = arith.mulf %53, %48 : vector<8x1xf32>
      %55 = arith.subf %52, %48 : vector<8x1xf32>
      %cst_37 = arith.constant 3.92156857E-4 : f32
      %56 = vector.broadcast %cst_37 : f32 to vector<8x1xf32>
      %57 = arith.mulf %56, %55 : vector<8x1xf32>
      %58 = arith.addf %54, %57 : vector<8x1xf32>
      %cst_38 = arith.constant 0.000000e+00 : f32
      %59 = vector.broadcast %cst_38 : f32 to vector<8x1xf32>
      %60 = arith.subf %59, %58 : vector<8x1xf32>
      %c0_39 = arith.constant 0 : index
      %c0_40 = arith.constant 0 : index
      %61 = vector.load %arg4[%c0_39, %c0_40] : memref<8x1xf32, #tpu.memory_space<vmem>>, vector<8x1xf32>
      tpu.vector_store %arg4[%c0_39, %c0_40], %60 {strides = array<i32>} : memref<8x1xf32, #tpu.memory_space<vmem>>, vector<8x1xf32>,
    } else {
    }
    return
  }
  func.func @transform_0(%arg0: i32, %arg1: i32) -> (i32, i32) {
    %c0_i32 = arith.constant 0 : i32
    %c0_i32_0 = arith.constant 0 : i32
    return %arg0, %c0_i32 : i32, i32
  }
  func.func @transform_1(%arg0: i32, %arg1: i32) -> (i32, i32) {
    %c0_i32 = arith.constant 0 : i32
    return %arg0, %arg1 : i32, i32
  }
  func.func @transform_2(%arg0: i32, %arg1: i32) -> (i32, i32) {
    %c0_i32 = arith.constant 0 : i32
    %c0_i32_0 = arith.constant 0 : i32
    return %arg0, %c0_i32 : i32, i32
  }
}

</mosaic_0001>

<llo_original>
// kernel: tpu_custom_call.1
$region0: #{tpu_custom_call.1}
  #allocation0 [shape = 'u32[]', space=smem, size = 0x4, offset = 0x4, fixed_abs, tag = 'smem constant byte address 0x4 - core index']
  #allocation1 [shape = 'u32[144,128]{1,0:T(1,128)}', space=vmem, size = 0x12000, scoped, tag = 'internal scratch']
  #allocation2 [shape = 'f32[8,1]{1,0:T(8,128)}', space=vmem, size = 0x1000, scoped, tag = 'scratch operand']
  #allocation3 [shape = 'f32[8,1]{1,0:T(8,128)}', space=vmem, size = 0x1000, scoped, tag = 'scratch operand']
  #allocation4 [shape = 'f32[8,1]{1,0:T(8,128)}', space=vmem, size = 0x1000, scoped, tag = 'scratch operand']
  #allocation5 [shape = 'f32[8,1]{1,0:T(8,128)}', space=vmem, size = 0x1000, scoped, tag = 'scratch operand']
  %s0 = inlined_call_operand.vmem [shape: s32[20,1], index: 0, kind: input, shape index: {}]
  %s1 = inlined_call_operand.hbm [shape: f32[20,256], index: 1, kind: input, shape index: {}]
  %s2 = inlined_call_operand.vmem [shape: f32[20,1], index: 2, kind: output, shape index: {}]
  %s3 = sld [smem:[#allocation0]]
  $region53: #{tpu_custom_call.1} parent=0
    _
  %s5 = ssub.s32 1, %s3
  %s6 = scalar_select 0, %s5, %s3
  $region1: #{tpu_custom_call.1} parent=0
    #allocation6 [shape = 'u8[8192]{0}', space=vmem, size = 0x2000, scoped, tag = 'input window, operand 1']
    #allocation7 [shape = 's32[2]{0}', space=sflag, size = 0x8, scoped, tag = 'scoped memory for tpu_custom_call.1']
    %7 = vsyncpa [#allocation7], 0
    %s8 = scalar_lea.sflag [#allocation7], 1
    %9 = vsyncpa %s8, 0
    loop: start=0, step=1, limit=8
    $region2: #{tpu_custom_call.1} parent=1 // loop_pre_header
      _
    $region3: #{tpu_custom_call.1} parent=1 // loop_header
      %s11 = sphi 0, %s15
      %p12 = scmp.ge.s32.totalorder %s11, 8
      %s18 = sphi 0, %s30
      %s19 = sphi 0, %s26
      %s20 = sphi 0, %s18
      %s21 = sphi 0, %s19
      %s22 = sphi 0, %s20
      %s23 = sphi 0, %s21
      %s33 = sphi 0, %s35
      %s36 = sphi 0, %s33
      %s37 = sphi 0, %s36
      %s53 = sphi 0, %s37
      %s61 = sphi 0, %s63
      %s64 = sphi 0, %s61
      %s65 = sphi 0, %s64
      %s81 = sphi 0, %s65
      %s87 = sphi 0, %s89
      %s90 = sphi 0, %s87
      %s91 = sphi 0, %s90
      %s107 = sphi 0, %s91
    $region4: #{tpu_custom_call.1} parent=1 // loop_header_branch
      %14 = sbr.rel (%p12) target = $region8
    $region5: #{tpu_custom_call.1} parent=1 // loop_body
      %s16 = ssub.s32 %s11, 1
      %s17 = ssub.s32 %s11, 2
      %s24 = sadd.s32 1, %s19
      %p25 = scmp.ge.s32.totalorder %s24, 2
      %s26 = scalar_select %p25, 0, %s24
      %s27 = sadd.s32 1, %s18
      %s28 = scalar_select %p25, %s27, %s18
      %p29 = scmp.ge.s32.totalorder %s28, 3
      %s30 = scalar_select %p29, 0, %s28
      %s31 = ssub.s32 %s18, %s30
      %p32 = scmp.eq.s32.totalorder %s31, 0
      %s34 = sadd.s32 %s33, 1
      %s35 = scalar_select %p32, %s33, %s34
      %p38 = pneg %p32
      %p39 = scmp.eq.s32.totalorder %s11, 5
      %p40 = por %p38, %p39
      %p41 = scmp.ne.s32.totalorder %s33, %s36
      %p42 = scmp.eq.s32.totalorder %s11, 0
      %p43 = por %p41, %p42
      %p44 = scmp.ne.s32.totalorder %s33, %s36
      %p45 = scmp.eq.s32.totalorder %s16, 5
      %p46 = por %p44, %p45
      %p47 = scmp.ne.s32.totalorder %s36, %s37
      %p48 = scmp.eq.s32.totalorder %s16, 0
      %p49 = por %p47, %p48
      %p50 = scmp.ne.s32.totalorder %s36, %s37
      %p51 = scmp.eq.s32.totalorder %s17, 5
      %p52 = por %p50, %p51
      %p54 = scmp.ne.s32.totalorder %s37, %s53
      %p55 = scmp.eq.s32.totalorder %s17, 0
      %p56 = por %p54, %p55
      %s57 = ssub.s32 %s18, %s30
      %s58 = ssub.s32 %s19, %s26
      %s59 = sor.u32 %s57, %s58
      %p60 = scmp.eq.s32.totalorder %s59, 0
      %s62 = sadd.s32 %s61, 1
      %s63 = scalar_select %p60, %s61, %s62
      %p66 = pneg %p60
      %p67 = scmp.eq.s32.totalorder %s11, 5
      %p68 = por %p66, %p67
      %p69 = scmp.ne.s32.totalorder %s61, %s64
      %p70 = scmp.eq.s32.totalorder %s11, 0
      %p71 = por %p69, %p70
      %p72 = scmp.ne.s32.totalorder %s61, %s64
      %p73 = scmp.eq.s32.totalorder %s16, 5
      %p74 = por %p72, %p73
      %p75 = scmp.ne.s32.totalorder %s64, %s65
      %p76 = scmp.eq.s32.totalorder %s16, 0
      %p77 = por %p75, %p76
      %p78 = scmp.ne.s32.totalorder %s64, %s65
      %p79 = scmp.eq.s32.totalorder %s17, 5
      %p80 = por %p78, %p79
      %p82 = scmp.ne.s32.totalorder %s65, %s81
      %p83 = scmp.eq.s32.totalorder %s17, 0
      %p84 = por %p82, %p83
      %s85 = ssub.s32 %s18, %s30
      %p86 = scmp.eq.s32.totalorder %s85, 0
      %s88 = sadd.s32 %s87, 1
      %s89 = scalar_select %p86, %s87, %s88
      %p92 = pneg %p86
      %p93 = scmp.eq.s32.totalorder %s11, 5
      %p94 = por %p92, %p93
      %p95 = scmp.ne.s32.totalorder %s87, %s90
      %p96 = scmp.eq.s32.totalorder %s11, 0
      %p97 = por %p95, %p96
      %p98 = scmp.ne.s32.totalorder %s87, %s90
      %p99 = scmp.eq.s32.totalorder %s16, 5
      %p100 = por %p98, %p99
      %p101 = scmp.ne.s32.totalorder %s90, %s91
      %p102 = scmp.eq.s32.totalorder %s16, 0
      %p103 = por %p101, %p102
      %p104 = scmp.ne.s32.totalorder %s90, %s91
      %p105 = scmp.eq.s32.totalorder %s17, 5
      %p106 = por %p104, %p105
      %p108 = scmp.ne.s32.totalorder %s91, %s107
      %p109 = scmp.eq.s32.totalorder %s17, 0
      %p110 = por %p108, %p109
      %p111 = scmp.le.s32.totalorder 1, %s11
      %p112 = scmp.lt.s32.totalorder %s11, 7
      %p113 = pnand %p111, %p112
      %p114 = pneg %p113
      // Predicated region
      $region9: #{tpu_custom_call.1} parent=5 // pred_check
        _
      $region10: #{tpu_custom_call.1} parent=5 // pred_check_branch
        %116 = sbr.rel (%p113) target = $region12
      $region11: #{tpu_custom_call.1} parent=5 // pred_region
        %s117 = ssub.s32 %s11, 1
      $region12: #{tpu_custom_call.1} parent=5 // pred_fallthru
        _
      %p118 = scmp.lt.s32.totalorder %s11, 6
      // Predicated region
      $region13: #{tpu_custom_call.1} parent=5 // pred_check
        %p119 = pneg %p118
      $region14: #{tpu_custom_call.1} parent=5 // pred_check_branch
        %121 = sbr.rel (%p119) target = $region16
      $region15: #{tpu_custom_call.1} parent=5 // pred_region
        // Predicated region
        $region17: #{tpu_custom_call.1} parent=15 // pred_check
          %p122 = pneg %p43
        $region18: #{tpu_custom_call.1} parent=15 // pred_check_branch
          %124 = sbr.rel (%p122) target = $region20
        $region19: #{tpu_custom_call.1} parent=15 // pred_region
          %p125 = scmp.lt.s32.totalorder %s18, 2
          %s126 = scalar_select %p125, %s18, 2
          %s127 = smul.addr %s126, 8
          %s128 = scalar_lea.vmem %s0, %s127
        $region20: #{tpu_custom_call.1} parent=15 // pred_fallthru
          _
        // Predicated region
        $region21: #{tpu_custom_call.1} parent=15 // pred_check
          %p129 = pneg %p71
        $region22: #{tpu_custom_call.1} parent=15 // pred_check_branch
          %131 = sbr.rel (%p129) target = $region24
        $region23: #{tpu_custom_call.1} parent=15 // pred_region
          %s132 = sand.u32 %s61, 1
          %s133 = scalar_lea.sflag [#allocation7], %s132
          %s134 = sand.u32 %s61, 1
          %s135 = smul.addr %s134, 8
          %s136 = scalar_lea.vmem [#allocation6], %s135
          %s138 = ssub.s32 128, 128
          %139 = vsyncadd %s133, %s138
          %s140 = smul.addr %s18, 2
          %s141 = sadd.s32 %s19, %s140
          %s142 = smul.addr %s141, 128
          %s143 = scalar_lea.hbm %s1, %s142
          %s145 = sshll.u32 %s136, 4
          %s146 = int_to_ptr.vmem [resolvable:$true] %s145
          %148 = dma.hbm_to_vmem [thread:$0]  %s143, 128, %s146, %s133
        $region24: #{tpu_custom_call.1} parent=15 // pred_fallthru
          _
      $region16: #{tpu_custom_call.1} parent=5 // pred_fallthru
        _
      %p149 = scmp.le.s32.totalorder 1, %s11
      %p150 = scmp.lt.s32.totalorder %s11, 7
      %p151 = pnand %p149, %p150
      %p152 = pneg %p151
      // Predicated region
      $region25: #{tpu_custom_call.1} parent=5 // pred_check
        _
      $region26: #{tpu_custom_call.1} parent=5 // pred_check_branch
        %154 = sbr.rel (%p151) target = $region28
      $region27: #{tpu_custom_call.1} parent=5 // pred_region
        %s155 = ssub.s32 %s11, 1
        %s156 = sand.u32 %s64, 1
        %s157 = scalar_lea.sflag [#allocation7], %s156
        %s158 = sand.u32 %s64, 1
        %s159 = smul.addr %s158, 8
        %s160 = scalar_lea.vmem [#allocation6], %s159
        // Predicated region
        $region29: #{tpu_custom_call.1} parent=27 // pred_check
          %p161 = pneg %p77
        $region30: #{tpu_custom_call.1} parent=27 // pred_check_branch
          %163 = sbr.rel (%p161) target = $region32
        $region31: #{tpu_custom_call.1} parent=27 // pred_region
          %164 = dma.done %s157, 128
        $region32: #{tpu_custom_call.1} parent=27 // pred_fallthru
          _
        %p165 = scmp.lt.s32.totalorder %s20, 2
        %s166 = scalar_select %p165, %s20, 2
        %s167 = smul.addr %s166, 8
        %s168 = scalar_lea.vmem %s0, %s167
        %p169 = pneg %p49
        %p170 = pneg %p46
        %s171 = sand.u32 %s64, 1
        %s172 = scalar_lea.sflag [#allocation7], %s171
        %s173 = sand.u32 %s64, 1
        %s174 = smul.addr %s173, 8
        %s175 = scalar_lea.vmem [#allocation6], %s174
        %p176 = pneg %p77
        %p177 = pneg %p74
        %p178 = pneg %p103
        %p179 = pneg %p100
        %p180 = scmp.lt.s32.totalorder %s20, 2
        %s181 = scalar_select %p180, %s20, 2
        %s182 = smul.addr %s181, 8
        %s183 = scalar_lea.vmem %s2, %s182
        %p184 = scmp.lt.s32.totalorder %s20, 2
        %s185 = scalar_select %p184, %s20, 2
        %s186 = smul.addr %s185, 8
        %s187 = scalar_lea.vmem %s0, %s186
        %p188 = scmp.lt.s32.totalorder %s20, 2
        %s189 = scalar_select %p188, %s20, 2
        %s190 = smul.addr %s189, 8
        %s191 = scalar_lea.vmem %s2, %s190
        %v192 = vld [vmem:[%s160] sm:$0xff]
        %v193 = vld [vmem:[%s187] sm:$0xff]
        %p194 = scmp.eq.s32.totalorder %s21, 0
        // Predicated region
        $region33: #{tpu_custom_call.1} parent=27 // pred_check
          %p195 = pneg %p194
        $region34: #{tpu_custom_call.1} parent=27 // pred_check_branch
          %197 = sbr.rel (%p195) target = $region36
        $region35: #{tpu_custom_call.1} parent=27 // pred_region
          %vm198 = vcmask 7168
          %199 = vst.msk [vmem:[#allocation2] sm:$0xff] %vm198, -inf
          %200 = vst.msk [vmem:[#allocation3] sm:$0xff] %vm198, 0.0
          %201 = vst.msk [vmem:[#allocation4] sm:$0xff] %vm198, 0.0
          %202 = vst.msk [vmem:[#allocation5] sm:$0xff] %vm198, 0.0
        $region36: #{tpu_custom_call.1} parent=27 // pred_fallthru
          _
        %v203 = vlaneseq
        %v204 = vand.u32 %v203, 127
        %s205 = smul.u32 %s21, 128
        %v206 = vstv %s205
        %v207 = vadd.s32 %v204, %v206
        %208 = vmax.xlane.f32.xlu0 %v192
        %v209 = vpop.xlane.xlu0 %208
        %v210 = vld [vmem:[#allocation2] sm:$0xff]
        %v211 = vmax.f32 %v210, %v209
        %v212 = vld [vmem:[#allocation3] sm:$0xff]
        %v213 = vsub.f32 %v210, %v211
        %v214 = vmul.f32 %v213, 1.442695
        %v215 = vpow.pop %v214
        %v216 = vmul.f32 %v212, %v215
        %218 = vset.pattern.permute.xlu0 0
        %219 = vperm.xlu0 %218, %v211
        %v220 = vpop.permute.xlu0 %219
        %v222 = vsub.f32 %v192, %v220
        %v223 = vmul.f32 %v222, 1.442695
        %v224 = vpow.pop %v223
        %225 = vadd.xlane.f32.xlu0 %v224
        %v226 = vpop.xlane.xlu0 %225
        %v227 = vadd.f32 %v216, %v226
        %vm228 = vcmask 7168
        %229 = vst.msk [vmem:[#allocation3] sm:$0xff] %vm228, %v227
        %230 = vst.msk [vmem:[#allocation2] sm:$0xff] %vm228, %v211
        %v231 = vld [vmem:[#allocation4] sm:$0xff]
        %232 = vadd.xlane.f32.xlu0 %v192
        %v233 = vpop.xlane.xlu0 %232
        %v234 = vadd.f32 %v231, %v233
        %235 = vst.msk [vmem:[#allocation4] sm:$0xff] %vm228, %v234
        %236 = vset.pattern.permute.xlu0 0
        %237 = vperm.xlu0 %236, %v193
        %v238 = vpop.permute.xlu0 %237
        %vm239 = vcmp.eq.s32.totalorder %v207, %v238
        %v240 = vld [vmem:[#allocation5] sm:$0xff]
        %v241 = vsel %vm239, %v192, 0.0
        %242 = vadd.xlane.f32.xlu0 %v241
        %v243 = vpop.xlane.xlu0 %242
        %v244 = vadd.f32 %v240, %v243
        %245 = vst.msk [vmem:[#allocation5] sm:$0xff] %vm228, %v244
        %p246 = scmp.eq.s32.totalorder %s21, 1
        // Predicated region
        $region37: #{tpu_custom_call.1} parent=27 // pred_check
          %p247 = pneg %p246
        $region38: #{tpu_custom_call.1} parent=27 // pred_check_branch
          %249 = sbr.rel (%p247) target = $region40
        $region39: #{tpu_custom_call.1} parent=27 // pred_region
          %v250 = vld [vmem:[#allocation2] sm:$0xff]
          %v251 = vld [vmem:[#allocation3] sm:$0xff]
          %v252 = vlog2.pop %v251
          %v253 = vmul.f32 %v252, 0.6931472
          %v254 = vadd.f32 %v250, %v253
          %v255 = vld [vmem:[#allocation5] sm:$0xff]
          %v256 = vsub.f32 %v255, %v254
          %v257 = vld [vmem:[#allocation4] sm:$0xff]
          %v258 = vmul.f32 %v254, 256.0
          %v259 = vsub.f32 %v257, %v258
          %v260 = vmul.f32 %v256, 0.9
          %v261 = vsub.f32 %v259, %v256
          %v262 = vmul.f32 %v261, 0.00039215686
          %v263 = vadd.f32 %v260, %v262
          %v264 = vsub.f32 0.0, %v263
          %265 = vst.msk [vmem:[%s191] sm:$0xff] %vm228, %v264
        $region40: #{tpu_custom_call.1} parent=27 // pred_fallthru
          _
        %p266 = scmp.lt.s32.totalorder %s20, 2
        %s267 = scalar_select %p266, %s20, 2
        %s268 = smul.addr %s267, 8
        %s269 = scalar_lea.vmem %s2, %s268
        // Predicated region
        $region41: #{tpu_custom_call.1} parent=27 // pred_check
          %p270 = pneg %p100
        $region42: #{tpu_custom_call.1} parent=27 // pred_check_branch
          %272 = sbr.rel (%p270) target = $region44
        $region43: #{tpu_custom_call.1} parent=27 // pred_region
          _
        $region44: #{tpu_custom_call.1} parent=27 // pred_fallthru
          _
      $region28: #{tpu_custom_call.1} parent=5 // pred_fallthru
        _
      %p273 = scmp.le.s32.totalorder 2, %s11
      // Predicated region
      $region45: #{tpu_custom_call.1} parent=5 // pred_check
        %p274 = pneg %p273
      $region46: #{tpu_custom_call.1} parent=5 // pred_check_branch
        %276 = sbr.rel (%p274) target = $region48
      $region47: #{tpu_custom_call.1} parent=5 // pred_region
        %s277 = ssub.s32 %s11, 2
        // Predicated region
        $region49: #{tpu_custom_call.1} parent=47 // pred_check
          %p278 = pneg %p106
        $region50: #{tpu_custom_call.1} parent=47 // pred_check_branch
          %280 = sbr.rel (%p278) target = $region52
        $region51: #{tpu_custom_call.1} parent=47 // pred_region
          %p281 = scmp.lt.s32.totalorder %s22, 2
          %s282 = scalar_select %p281, %s22, 2
          %s283 = smul.addr %s282, 8
          %s284 = scalar_lea.vmem %s2, %s283
        $region52: #{tpu_custom_call.1} parent=47 // pred_fallthru
          _
      $region48: #{tpu_custom_call.1} parent=5 // pred_fallthru
        _
    $region6: #{tpu_custom_call.1} parent=1 // loop_footer
      %s15 = sadd.s32 1, %s11
    $region7: #{tpu_custom_call.1} parent=1 // loop_footer_branch
      %10 = sbr.rel target = $region3
    $region8: #{tpu_custom_call.1} parent=1 // loop_exit
      _
    %285 = vsyncpa [#allocation7], 1
    %s286 = scalar_lea.sflag [#allocation7], 1
    %287 = vsyncpa %s286, 1

</llo_original>
